<compile_context>
chip_gen: v7x
topology: tpu7x:2x2x1
jax: 0.10.0
libtpu: 0.0.40
codegen_flags: <defaults>
</compile_context>

<pallas_src>
import functools

import jax
import jax.numpy as jnp
from jax.experimental import pallas as pl
from jax.experimental.pallas import tpu as pltpu


LANE = 128      # lane width: keep last dims multiples of this (lane-dense)
SUBLANE = 8     # sublane granularity for f32


# ------------------------------ small helpers ------------------------------

def _round_up(x, m):
    return (x + m - 1) // m * m


def _pad_to(a, axis, target):
    """Zero-pad `a` along `axis` up to size `target`."""
    pad = target - a.shape[axis]
    if pad <= 0:
        return a
    widths = [(0, 0)] * a.ndim
    widths[axis] = (0, pad)
    return jnp.pad(a, widths)


def _pick_tile(dim, candidates):
    for c in candidates:
        if dim % c == 0:
            return c
    return dim


# -------------------- kernel 1: tiled matmul + bias (MXU) -------------------

def _matmul_bias_kernel(x_ref, w_ref, b_ref, o_ref, acc_ref):
    @pl.when(pl.program_id(2) == 0)
    def _init():
        acc_ref[...] = jnp.zeros_like(acc_ref)

    acc_ref[...] += jnp.dot(x_ref[...], w_ref[...],
                            preferred_element_type=jnp.float32)

    @pl.when(pl.program_id(2) == pl.num_programs(2) - 1)
    def _finalize():
        o_ref[...] = (acc_ref[...] + b_ref[...]).astype(o_ref.dtype)


def _matmul_bias(x, w, b):
    """(M,K) @ (K,Cout) + b.  K and Cout are zero-padded to multiples of 128
    (lane-dense), M to a multiple of 8.  Inputs are cast to bf16 for the MXU,
    accumulation stays f32.  Returns (M, round_up(Cout,128)) f32; the padded
    output columns are exactly zero."""
    M, K = x.shape
    K2, Cout = w.shape
    assert K == K2
    Mp = _round_up(M, SUBLANE)
    Kp = _round_up(K, LANE)
    Np = _round_up(Cout, LANE)

    tm = _pick_tile(Mp, (256, 128, 64, 32, 16, 8))
    tn = _pick_tile(Np, (256, 128))
    tk = _pick_tile(Kp, (512, 384, 256, 128))

    xp = _pad_to(_pad_to(x, 1, Kp), 0, Mp).astype(jnp.bfloat16)
    wp = _pad_to(_pad_to(w, 0, Kp), 1, Np).astype(jnp.bfloat16)
    bp = _pad_to(b.reshape(1, Cout), 1, Np).astype(jnp.float32)

    grid = (Mp // tm, Np // tn, Kp // tk)
    # double-buffered bf16 inputs + f32 accumulator + double-buffered f32 out
    vmem_need = (2 * (tm * tk + tk * tn) * 2 + 2 * tn * 4
                 + tm * tn * 4 + 2 * tm * tn * 4)
    vmem_limit = int(min(max(4 * vmem_need, 8 << 20), 48 << 20))

    out = pl.pallas_call(
        _matmul_bias_kernel,
        out_shape=jax.ShapeDtypeStruct((Mp, Np), jnp.float32),
        grid=grid,
        in_specs=[
            pl.BlockSpec((tm, tk), lambda i, j, k: (i, k)),
            pl.BlockSpec((tk, tn), lambda i, j, k: (k, j)),
            pl.BlockSpec((1, tn), lambda i, j, k: (0, j)),
        ],
        out_specs=pl.BlockSpec((tm, tn), lambda i, j, k: (i, j)),
        scratch_shapes=[pltpu.VMEM((tm, tn), jnp.float32)],
        compiler_params=pltpu.CompilerParams(
            dimension_semantics=("parallel", "parallel", "arbitrary"),
            vmem_limit_bytes=vmem_limit),
        cost_estimate=pl.CostEstimate(
            flops=2 * Mp * Np * Kp,
            transcendentals=0,
            bytes_accessed=Mp * Kp * 2 + Kp * Np * 2 + Mp * Np * 4),
    )(xp, wp, bp)
    return out[:M]


# --------- kernel 2: 3x3 stride-1 conv with an in-kernel tap loop -----------

def _conv3x3_kernel(x_ref, w_ref, b_ref, o_ref):
    # x_ref: (1, H+2, Wp+2, Cin)  spatially zero-padded input (bf16)
    # w_ref: (9, Cin, tn) bf16 ; b_ref: (1, tn) f32 ; o_ref: (1, H, Wp, tn) f32
    _, Ho, Wo, tn = o_ref.shape
    acc = jnp.zeros((Ho * Wo, tn), jnp.float32)
    for t in range(9):                       # unrolled 3x3 tap loop
        ky, kx = divmod(t, 3)
        tap = x_ref[0, ky:ky + Ho, kx:kx + Wo, :].reshape(Ho * Wo, -1)
        acc += jnp.dot(tap, w_ref[t], preferred_element_type=jnp.float32)
    acc += b_ref[...]
    o_ref[...] = acc.reshape(1, Ho, Wo, tn).astype(o_ref.dtype)


def conv3x3_same(x_nhwc, w_oihw, b):
    """3x3, stride 1, padding 1.  x must be channel-padded to a multiple of
    128 (it is an `inner` map); output channels are padded to a multiple of
    128.  No im2col intermediate in HBM: the 9 taps are read as shifted
    windows inside the kernel."""
    N, H, W, Cin = x_nhwc.shape
    assert Cin % LANE == 0
    Cout = w_oihw.shape[0]
    Np = _round_up(Cout, LANE)
    Wp = _round_up(W, SUBLANE)          # sublane-aligned output width
    tn = LANE

    # spatial zero-padding: 1 on each side + extra right cols up to Wp
    x_pad = jnp.pad(x_nhwc, ((0, 0), (1, 1), (1, 1 + (Wp - W)), (0, 0)))
    x_pad = x_pad.astype(jnp.bfloat16)

    w_p = _pad_to(_pad_to(w_oihw, 1, Cin), 0, Np)       # (Np, Cin, 3, 3)
    w_k = jnp.transpose(w_p, (2, 3, 1, 0)).reshape(9, Cin, Np)
    w_k = w_k.astype(jnp.bfloat16)
    b_p = _pad_to(b.reshape(1, Cout), 1, Np).astype(jnp.float32)

    grid = (N, Np // tn)
    out = pl.pallas_call(
        _conv3x3_kernel,
        out_shape=jax.ShapeDtypeStruct((N, H, Wp, Np), jnp.float32),
        grid=grid,
        in_specs=[
            pl.BlockSpec((1, H + 2, Wp + 2, Cin), lambda n, j: (n, 0, 0, 0)),
            pl.BlockSpec((9, Cin, tn), lambda n, j: (0, 0, j)),
            pl.BlockSpec((1, tn), lambda n, j: (0, j)),
        ],
        out_specs=pl.BlockSpec((1, H, Wp, tn), lambda n, j: (n, 0, 0, j)),
        compiler_params=pltpu.CompilerParams(
            dimension_semantics=("parallel", "parallel"),
            vmem_limit_bytes=48 << 20),
    )(x_pad, w_k, b_p)
    # TODO(synk): at production resolutions, tile H with a 1-row halo (manual
    # DMA / element offsets) instead of keeping the full padded map in VMEM.
    return out[:, :, :W, :]


# ---------------- kernel 3: fused x2-nearest upsample + add -----------------

def _upsample_add_kernel(f_ref, c_ref, o_ref):
    # f_ref: (1, 2, w2, 2C) two fine rows, W split as (w2, 2) into lanes
    # c_ref: (1, 1, w2, C)  matching coarse row
    c = c_ref[...]
    up = jnp.concatenate([c, c], axis=-1)      # duplicate along W (lane concat)
    o_ref[...] = f_ref[...] + up               # broadcast duplicates along H


def upsample_add(fine, coarse):
    """fine + nearest_x2_upsample(coarse), fused (no HBM upsample copy)."""
    N, H, W, C = fine.shape
    h2, w2 = H // 2, W // 2
    assert coarse.shape == (N, h2, w2, C) and C % LANE == 0
    fv = fine.reshape(N, H, w2, 2 * C)          # metadata-only view of W=(w2,2)
    out = pl.pallas_call(
        _upsample_add_kernel,
        out_shape=jax.ShapeDtypeStruct(fv.shape, fine.dtype),
        grid=(N, h2),
        in_specs=[
            pl.BlockSpec((1, 2, w2, 2 * C), lambda n, i: (n, i, 0, 0)),
            pl.BlockSpec((1, 1, w2, C), lambda n, i: (n, i, 0, 0)),
        ],
        out_specs=pl.BlockSpec((1, 2, w2, 2 * C), lambda n, i: (n, i, 0, 0)),
        compiler_params=pltpu.CompilerParams(
            dimension_semantics=("parallel", "parallel")),
    )(fv, coarse)
    # TODO(synk): like the reference, assumes exact scale_factor=2 (even H/W);
    # general F.interpolate target sizes are not handled.
    return out.reshape(N, H, W, C)


# ------------------------------- conv wrappers ------------------------------

def conv1x1(x_nhwc, w_oihw, b):
    """1x1 conv = reshape + tiled matmul (no im2col).  Output channels padded
    to a multiple of 128 (exact zeros)."""
    N, H, W, Cin = x_nhwc.shape
    Cout = w_oihw.shape[0]
    w2 = w_oihw.reshape(Cout, Cin).T                   # (Cin, Cout)
    out = _matmul_bias(x_nhwc.reshape(N * H * W, Cin), w2, b)
    return out.reshape(N, H, W, -1)


def _im2col(x, kh, kw, stride, pad):
    N, H, W, C = x.shape
    xp = jnp.pad(x, ((0, 0), (pad, pad), (pad, pad), (0, 0)))
    Ho = (H + 2 * pad - kh) // stride + 1
    Wo = (W + 2 * pad - kw) // stride + 1
    taps = [xp[:, ky:ky + stride * Ho:stride, kx:kx + stride * Wo:stride, :]
            for ky in range(kh) for kx in range(kw)]
    patches = jnp.stack(taps, axis=3)                  # (N, Ho, Wo, kh*kw, C)
    return patches.reshape(N * Ho * Wo, kh * kw * C), (N, Ho, Wo)


def conv3x3_stride2(x_nhwc, w_oihw, b):
    """3x3 / stride 2 / pad 1 conv, only used for the tiny p6/p7 top-block
    maps (<= 4x4 spatial), where im2col expansion is negligible; the matmul
    still runs through the tiled Pallas kernel."""
    Cin = x_nhwc.shape[-1]
    Cout = w_oihw.shape[0]
    w_p = _pad_to(w_oihw, 1, Cin)                      # match padded channels
    patches, (N, Ho, Wo) = _im2col(x_nhwc, 3, 3, 2, 1)
    w2 = jnp.transpose(w_p, (2, 3, 1, 0)).reshape(9 * Cin, Cout)
    out = _matmul_bias(patches, w2, b)
    return out.reshape(N, Ho, Wo, -1)


# ----------------------------- FPN parameters -------------------------------

def init_fpn_params(key, in_channels_list, out_channels):
    def conv_init(k, cout, cin, kh, kw):
        k1, k2 = jax.random.split(k)
        fan_in = cin * kh * kw
        bound = fan_in ** -0.5
        w = jax.random.uniform(k1, (cout, cin, kh, kw), jnp.float32, -bound, bound)
        b = jax.random.uniform(k2, (cout,), jnp.float32, -bound, bound)
        return w, b

    n = len(in_channels_list)
    keys = jax.random.split(key, 2 * n + 2)
    return {
        "in_convs": [conv_init(keys[i], out_channels, cin, 1, 1)
                     for i, cin in enumerate(in_channels_list)],
        "out_convs": [conv_init(keys[n + i], out_channels, out_channels, 3, 3)
                      for i in range(n)],
        "p6": conv_init(keys[2 * n], out_channels, out_channels, 3, 3),
        "p7": conv_init(keys[2 * n + 1], out_channels, out_channels, 3, 3),
    }


# ------------------------------ FPN forward ---------------------------------

def fpn_forward(params, xs_nchw):
    """Mirror of FPN.forward; xs_nchw[-1] is the coarsest feature map."""
    xs = [jnp.transpose(x, (0, 2, 3, 1)) for x in xs_nchw]   # NCHW -> NHWC
    n = len(xs)
    outs = []

    inner = conv1x1(xs[-1], *params["in_convs"][-1])          # 1x1 lateral
    outs.insert(0, conv3x3_same(inner, *params["out_convs"][-1]))

    # FPNTopBlocks: p6 on `inner`, p7 = conv(relu(p6)); ReLU applied once.
    p6 = conv3x3_stride2(inner, *params["p6"])
    p7 = conv3x3_stride2(jnp.maximum(p6, 0.0), *params["p7"])
    outs.extend([p6, p7])

    # Top-down path (out_conv is applied BEFORE merging, exactly as in the ref)
    for idx in range(n - 2, -1, -1):
        coarse = inner
        inner = conv1x1(xs[idx], *params["in_convs"][idx])
        outs.insert(0, conv3x3_same(inner, *params["out_convs"][idx]))
        inner = upsample_add(inner, coarse)   # fused x2-nearest upsample + add

    cout = params["out_convs"][0][1].shape[0]                 # true channels
    return [jnp.transpose(o[..., :cout], (0, 3, 1, 2)) for o in outs]


# ----------------------- pure-XLA references (sanity) ------------------------

def _conv_ref(x_nhwc, w_oihw, b, *, stride=1, pad=0, cast_bf16=True):
    if cast_bf16:   # emulate the bf16 MXU inputs of the Pallas path
        x_nhwc = x_nhwc.astype(jnp.bfloat16).astype(jnp.float32)
        w_oihw = w_oihw.astype(jnp.bfloat16).astype(jnp.float32)
    out = jax.lax.conv_general_dilated(
        x_nhwc, jnp.transpose(w_oihw, (2, 3, 1, 0)),
        window_strides=(stride, stride),
        padding=[(pad, pad), (pad, pad)],
        dimension_numbers=("NHWC", "HWIO", "NHWC"),
        preferred_element_type=jnp.float32)
    return out + b.reshape(1, 1, 1, -1)


def fpn_forward_ref(params, xs_nchw, *, emulate_bf16=True):
    conv = functools.partial(_conv_ref, cast_bf16=emulate_bf16)
    xs = [jnp.transpose(x, (0, 2, 3, 1)) for x in xs_nchw]
    outs = []
    w, b = params["in_convs"][-1]
    inner = conv(xs[-1], w, b)
    w, b = params["out_convs"][-1]
    outs.insert(0, conv(inner, w, b, pad=1))
    w, b = params["p6"]
    p6 = conv(inner, w, b, stride=2, pad=1)
    w, b = params["p7"]
    p7 = conv(jnp.maximum(p6, 0.0), w, b, stride=2, pad=1)
    outs.extend([p6, p7])
    for idx in range(len(xs) - 2, -1, -1):
        up = jnp.repeat(jnp.repeat(inner, 2, axis=1), 2, axis=2)
        w, b = params["in_convs"][idx]
        inner = conv(xs[idx], w, b)
        w, b = params["out_convs"][idx]
        outs.insert(0, conv(inner, w, b, pad=1))
        inner = inner + up
    return [jnp.transpose(o, (0, 3, 1, 2)) for o in outs]


# ----------------------------------- main ------------------------------------

if __name__ == "__main__":
    key = jax.random.PRNGKey(0)
    in_channels_list = [4, 8, 16]
    out_channels = 8

    pkey, xkey = jax.random.split(key)
    params = init_fpn_params(pkey, in_channels_list, out_channels)

    xkeys = jax.random.split(xkey, 3)
    xs = [
        jax.random.normal(xkeys[0], (2, 4, 16, 16), jnp.float32),
        jax.random.normal(xkeys[1], (2, 8, 8, 8), jnp.float32),
        jax.random.normal(xkeys[2], (2, 16, 4, 4), jnp.float32),
    ]

    outs = jax.block_until_ready(fpn_forward(params, xs))

    expected_shapes = [(2, 8, 16, 16), (2, 8, 8, 8), (2, 8, 4, 4),
                       (2, 8, 2, 2), (2, 8, 1, 1)]
    assert [tuple(o.shape) for o in outs] == expected_shapes

    # Tight check vs an XLA reference with matching bf16 input rounding.
    refs_bf16 = fpn_forward_ref(params, xs, emulate_bf16=True)
    for o, r in zip(outs, refs_bf16):
        assert o.shape == r.shape
        assert jnp.allclose(o, r, atol=2e-3, rtol=2e-3), "mismatch vs bf16 ref"

    # Loose check vs the pure-f32 reference (bounds the bf16 MXU error).
    refs_f32 = fpn_forward_ref(params, xs, emulate_bf16=False)
    for o, r in zip(outs, refs_f32):
        assert jnp.allclose(o, r, atol=5e-2, rtol=5e-2), "mismatch vs f32 ref"

    print("KERNEL_OK")
</pallas_src>

<mosaic_0001>
module attributes {stable_mosaic.version = 11 : i64} {
  func.func @_matmul_bias_kernel(%arg0: i32, %arg1: i32, %arg2: i32, %arg3: memref<32x128xbf16, #tpu.memory_space<vmem>>, %arg4: memref<128x128xbf16, #tpu.memory_space<vmem>>, %arg5: memref<1x128xf32, #tpu.memory_space<vmem>>, %arg6: memref<32x128xf32, #tpu.memory_space<vmem>>, %arg7: memref<32x128xf32, #tpu.memory_space<vmem>>) attributes {dimension_semantics = [#tpu.dimension_semantics<parallel>, #tpu.dimension_semantics<parallel>, #tpu.dimension_semantics<arbitrary>], iteration_bounds = array<i64: 1, 1, 1>, scalar_prefetch = 0 : i64, scratch_operands = 1 : i64, tpu.core_type = #tpu.core_type<tc>, window_params = [{transform_indices = @transform_0, window_bounds = array<i64: 32, 128>}, {transform_indices = @transform_1, window_bounds = array<i64: 128, 128>}, {transform_indices = @transform_2, window_bounds = array<i64: 1, 128>}, {transform_indices = @transform_3, window_bounds = array<i64: 32, 128>}]} {
    %c0_i32 = arith.constant 0 : i32
    %0 = arith.cmpi eq, %arg2, %c0_i32 : i32
    %1 = arith.extui %0 : i1 to i32
    %c0_i32_0 = arith.constant 0 : i32
    %2 = arith.cmpi ne, %1, %c0_i32_0 : i32
    scf.if %2 {
      %cst_10 = arith.constant 0.000000e+00 : f32
      %12 = vector.broadcast %cst_10 : f32 to vector<32x128xf32>
      %c0_11 = arith.constant 0 : index
      %c0_12 = arith.constant 0 : index
      %13 = vector.load %arg7[%c0_11, %c0_12] : memref<32x128xf32, #tpu.memory_space<vmem>>, vector<32x128xf32>
      tpu.vector_store %arg7[%c0_11, %c0_12], %12 {strides = array<i32>} : memref<32x128xf32, #tpu.memory_space<vmem>>, vector<32x128xf32>,
    } else {
    }
    %c0 = arith.constant 0 : index
    %c0_1 = arith.constant 0 : index
    %3 = vector.load %arg7[%c0, %c0_1] : memref<32x128xf32, #tpu.memory_space<vmem>>, vector<32x128xf32>
    %c0_2 = arith.constant 0 : index
    %c0_3 = arith.constant 0 : index
    %4 = vector.load %arg3[%c0_2, %c0_3] : memref<32x128xbf16, #tpu.memory_space<vmem>>, vector<32x128xbf16>
    %c0_4 = arith.constant 0 : index
    %c0_5 = arith.constant 0 : index
    %5 = vector.load %arg4[%c0_4, %c0_5] : memref<128x128xbf16, #tpu.memory_space<vmem>>, vector<128x128xbf16>
    %cst = arith.constant dense<0.000000e+00> : vector<32x128xf32>
    %6 = tpu.matmul %4, %5, %cst {dimension_numbers = #tpu.dot_dimension_numbers<[1], [0], [0], [1], [0, 0, 1, 1], [], []>} : vector<32x128xbf16>, vector<128x128xbf16>, vector<32x128xf32> -> vector<32x128xf32>
    %7 = arith.addf %3, %6 : vector<32x128xf32>
    %c0_6 = arith.constant 0 : index
    %c0_7 = arith.constant 0 : index
    %8 = vector.load %arg7[%c0_6, %c0_7] : memref<32x128xf32, #tpu.memory_space<vmem>>, vector<32x128xf32>
    tpu.vector_store %arg7[%c0_6, %c0_7], %7 {strides = array<i32>} : memref<32x128xf32, #tpu.memory_space<vmem>>, vector<32x128xf32>,
    %c0_i32_8 = arith.constant 0 : i32
    %9 = arith.cmpi eq, %arg2, %c0_i32_8 : i32
    %10 = arith.extui %9 : i1 to i32
    %c0_i32_9 = arith.constant 0 : i32
    %11 = arith.cmpi ne, %10, %c0_i32_9 : i32
    scf.if %11 {
      %c0_10 = arith.constant 0 : index
      %c0_11 = arith.constant 0 : index
      %12 = vector.load %arg7[%c0_10, %c0_11] : memref<32x128xf32, #tpu.memory_space<vmem>>, vector<32x128xf32>
      %c0_12 = arith.constant 0 : index
      %c0_13 = arith.constant 0 : index
      %13 = vector.load %arg5[%c0_12, %c0_13] : memref<1x128xf32, #tpu.memory_space<vmem>>, vector<1x128xf32>
      %14 = vector.broadcast %13 : vector<1x128xf32> to vector<32x128xf32>
      %15 = arith.addf %12, %14 : vector<32x128xf32>
      %c0_14 = arith.constant 0 : index
      %c0_15 = arith.constant 0 : index
      %16 = vector.load %arg6[%c0_14, %c0_15] : memref<32x128xf32, #tpu.memory_space<vmem>>, vector<32x128xf32>
      tpu.vector_store %arg6[%c0_14, %c0_15], %15 {strides = array<i32>} : memref<32x128xf32, #tpu.memory_space<vmem>>, vector<32x128xf32>,
    } else {
    }
    return
  }
  func.func @transform_0(%arg0: i32, %arg1: i32, %arg2: i32) -> (i32, i32) {
    %c0_i32 = arith.constant 0 : i32
    return %arg0, %arg2 : i32, i32
  }
  func.func @transform_1(%arg0: i32, %arg1: i32, %arg2: i32) -> (i32, i32) {
    %c0_i32 = arith.constant 0 : i32
    return %arg2, %arg1 : i32, i32
  }
  func.func @transform_2(%arg0: i32, %arg1: i32, %arg2: i32) -> (i32, i32) {
    %c0_i32 = arith.constant 0 : i32
    %c0_i32_0 = arith.constant 0 : i32
    return %c0_i32, %arg1 : i32, i32
  }
  func.func @transform_3(%arg0: i32, %arg1: i32, %arg2: i32) -> (i32, i32) {
    %c0_i32 = arith.constant 0 : i32
    return %arg0, %arg1 : i32, i32
  }
}

</mosaic_0001>

<llo_original>
// kernel: tpu_custom_call.1
$region0: #{tpu_custom_call.1}
  #allocation0 [shape = 'u32[]', space=smem, size = 0x4, offset = 0x4, fixed_abs, tag = 'smem constant byte address 0x4 - core index']
  #allocation1 [shape = 'u32[144,128]{1,0:T(1,128)}', space=vmem, size = 0x12000, scoped, tag = 'internal scratch']
  #allocation2 [shape = 'f32[32,128]{1,0:T(8,128)}', space=vmem, size = 0x4000, scoped, tag = 'scratch operand']
  %s0 = inlined_call_operand.hbm [shape: bf16[32,128], index: 0, kind: input, shape index: {}]
  %s1 = inlined_call_operand.hbm [shape: bf16[128,128], index: 1, kind: input, shape index: {}]
  %s2 = inlined_call_operand.vmem [shape: f32[1,128], index: 2, kind: input, shape index: {}]
  %s3 = inlined_call_operand.hbm [shape: f32[32,128], index: 3, kind: output, shape index: {}]
  %s4 = sld [smem:[#allocation0]]
  $region38: #{tpu_custom_call.1} parent=0
    _
  %s6 = ssub.s32 1, %s4
  %s7 = scalar_select 0, %s6, %s4
  $region1: #{tpu_custom_call.1} parent=0
    #allocation3 [shape = 'u8[8192]{0}', space=vmem, size = 0x2000, scoped, tag = 'input window, operand 0, single buffered']
    #allocation4 [shape = 's32[1]{0}', space=sflag, size = 0x4, scoped, tag = 'scoped memory for tpu_custom_call.1']
    #allocation5 [shape = 's32[1]{0}', space=sflag, size = 0x4, scoped, tag = 'scoped memory for tpu_custom_call.1']
    #allocation6 [shape = 'u8[32768]{0}', space=vmem, size = 0x8000, scoped, tag = 'input window, operand 1, single buffered']
    #allocation7 [shape = 's32[1]{0}', space=sflag, size = 0x4, scoped, tag = 'scoped memory for tpu_custom_call.1']
    #allocation8 [shape = 'u8[16384]{0}', space=vmem, size = 0x4000, scoped, tag = 'output window, operand 0, single buffered']
    %8 = vsyncpa [#allocation4], 0
    %9 = vsyncpa [#allocation7], 0
    %10 = vsyncpa [#allocation5], 0
    // Predicated region
    $region2: #{tpu_custom_call.1} parent=1 // pred_check
      _
    $region3: #{tpu_custom_call.1} parent=1 // pred_check_branch
      %12 = sbr.rel (0) target = $region5
    $region4: #{tpu_custom_call.1} parent=1 // pred_region
      %s14 = ssub.s32 256, 256
      %15 = vsyncadd [#allocation4], %s14
      %s16 = sshll.u32 [#allocation3], 4
      %s17 = int_to_ptr.vmem [resolvable:$true] %s16
      %22 = dma.hbm_to_vmem [thread:$0]  %s0, 256, %s17, [#allocation4], 64, 64, 4
    $region5: #{tpu_custom_call.1} parent=1 // pred_fallthru
      _
    // Predicated region
    $region6: #{tpu_custom_call.1} parent=1 // pred_check
      _
    $region7: #{tpu_custom_call.1} parent=1 // pred_check_branch
      %24 = sbr.rel (0) target = $region9
    $region8: #{tpu_custom_call.1} parent=1 // pred_region
      %s26 = ssub.s32 1024, 1024
      %27 = vsyncadd [#allocation7], %s26
      %s28 = sshll.u32 [#allocation6], 4
      %s29 = int_to_ptr.vmem [resolvable:$true] %s28
      %34 = dma.hbm_to_vmem [thread:$0]  %s1, 1024, %s29, [#allocation7], 64, 64, 4
    $region9: #{tpu_custom_call.1} parent=1 // pred_fallthru
      _
    // Predicated region
    $region10: #{tpu_custom_call.1} parent=1 // pred_check
      _
    $region11: #{tpu_custom_call.1} parent=1 // pred_check_branch
      %36 = sbr.rel (0) target = $region13
    $region12: #{tpu_custom_call.1} parent=1 // pred_region
      _
    $region13: #{tpu_custom_call.1} parent=1 // pred_fallthru
      _
    // Predicated region
    $region14: #{tpu_custom_call.1} parent=1 // pred_check
      _
    $region15: #{tpu_custom_call.1} parent=1 // pred_check_branch
      %38 = sbr.rel (0) target = $region17
    $region16: #{tpu_custom_call.1} parent=1 // pred_region
      %39 = dma.done [#allocation4], 256
    $region17: #{tpu_custom_call.1} parent=1 // pred_fallthru
      _
    // Predicated region
    $region18: #{tpu_custom_call.1} parent=1 // pred_check
      _
    $region19: #{tpu_custom_call.1} parent=1 // pred_check_branch
      %41 = sbr.rel (0) target = $region21
    $region20: #{tpu_custom_call.1} parent=1 // pred_region
      %42 = dma.done [#allocation7], 1024
    $region21: #{tpu_custom_call.1} parent=1 // pred_fallthru
      _
    %p44 = scmp.eq.s32.totalorder 0, 0
    // Predicated region
    $region22: #{tpu_custom_call.1} parent=1 // pred_check
      %p45 = pneg %p44
    $region23: #{tpu_custom_call.1} parent=1 // pred_check_branch
      %47 = sbr.rel (%p45) target = $region25
    $region24: #{tpu_custom_call.1} parent=1 // pred_region
      %48 = vst [vmem:[#allocation2] sm:$0xff] 0.0
      %49 = vst [vmem:[#allocation2 + $0x8] sm:$0xff] 0.0
      %50 = vst [vmem:[#allocation2 + $0x10] sm:$0xff] 0.0
      %51 = vst [vmem:[#allocation2 + $0x18] sm:$0xff] 0.0
    $region25: #{tpu_custom_call.1} parent=1 // pred_fallthru
      _
    %v52 = vld [vmem:[#allocation2] sm:$0xff]
    %v53 = vld [vmem:[#allocation2 + $0x8] sm:$0xff]
    %v54 = vld [vmem:[#allocation2 + $0x10] sm:$0xff]
    %v55 = vld [vmem:[#allocation2 + $0x18] sm:$0xff]
    %v56 = vld [vmem:[#allocation3] sm:$0xf]
    %v57 = vld [vmem:[#allocation3 + $0x4] sm:$0xf]
    %v58 = vld [vmem:[#allocation3 + $0x8] sm:$0xf]
    %v59 = vld [vmem:[#allocation3 + $0xc] sm:$0xf]
    %v60 = vld [vmem:[#allocation6] sm:$0xf]
    %v61 = vld [vmem:[#allocation6 + $0x4] sm:$0xf]
    %v62 = vld [vmem:[#allocation6 + $0x8] sm:$0xf]
    %v63 = vld [vmem:[#allocation6 + $0xc] sm:$0xf]
    %v64 = vld [vmem:[#allocation6 + $0x10] sm:$0xf]
    %v65 = vld [vmem:[#allocation6 + $0x14] sm:$0xf]
    %v66 = vld [vmem:[#allocation6 + $0x18] sm:$0xf]
    %v67 = vld [vmem:[#allocation6 + $0x1c] sm:$0xf]
    %v68 = vld [vmem:[#allocation6 + $0x20] sm:$0xf]
    %v69 = vld [vmem:[#allocation6 + $0x24] sm:$0xf]
    %v70 = vld [vmem:[#allocation6 + $0x28] sm:$0xf]
    %v71 = vld [vmem:[#allocation6 + $0x2c] sm:$0xf]
    %v72 = vld [vmem:[#allocation6 + $0x30] sm:$0xf]
    %v73 = vld [vmem:[#allocation6 + $0x34] sm:$0xf]
    %v74 = vld [vmem:[#allocation6 + $0x38] sm:$0xf]
    %v75 = vld [vmem:[#allocation6 + $0x3c] sm:$0xf]
    %v80 = vunpack.c.l.b16 %v56
    %v81 = vunpack.c.l.b16 %v57
    %v82 = vunpack.c.l.b16 %v58
    %v83 = vunpack.c.l.b16 %v59
    %v84 = vpack.c.b16 %v81, %v80
    %v85 = vpack.c.b16 %v83, %v82
    %v104 = vunpack.c.l.b16 %v60
    %v105 = vunpack.c.l.b16 %v61
    %v106 = vunpack.c.l.b16 %v62
    %v107 = vunpack.c.l.b16 %v63
    %v108 = vunpack.c.l.b16 %v64
    %v109 = vunpack.c.l.b16 %v65
    %v110 = vunpack.c.l.b16 %v66
    %v111 = vunpack.c.l.b16 %v67
    %v112 = vunpack.c.l.b16 %v68
    %v113 = vunpack.c.l.b16 %v69
    %v114 = vunpack.c.l.b16 %v70
    %v115 = vunpack.c.l.b16 %v71
    %v116 = vunpack.c.l.b16 %v72
    %v117 = vunpack.c.l.b16 %v73
    %v118 = vunpack.c.l.b16 %v74
    %v119 = vunpack.c.l.b16 %v75
    %v120 = vpack.c.b16 %v105, %v104
    %v121 = vpack.c.b16 %v107, %v106
    %v122 = vpack.c.b16 %v109, %v108
    %v123 = vpack.c.b16 %v111, %v110
    %v124 = vpack.c.b16 %v113, %v112
    %v125 = vpack.c.b16 %v115, %v114
    %v126 = vpack.c.b16 %v117, %v116
    %v127 = vpack.c.b16 %v119, %v118
    %136 = vmatprep.subr.bf16.mxu0 0
    %137 = vmatpush1.bf16.msra.mxu0 %v120
    %138 = vmatprep.subr.bf16.mxu0 0
    %139 = vmatpush1.bf16.msra.mxu0 %v121
    %140 = vmatprep.subr.bf16.mxu0 0
    %141 = vmatpush1.bf16.msra.mxu0 %v122
    %142 = vmatprep.subr.bf16.mxu0 0
    %143 = vmatpush1.bf16.msra.mxu0 %v123
    %144 = vmatprep.subr.bf16.mxu0 0
    %145 = vmatpush1.bf16.msra.mxu0 %v124
    %146 = vmatprep.subr.bf16.mxu0 0
    %147 = vmatpush1.bf16.msra.mxu0 %v125
    %148 = vmatprep.subr.bf16.mxu0 0
    %149 = vmatpush1.bf16.msra.mxu0 %v126
    %150 = vmatprep.subr.bf16.mxu0 0
    %151 = vmatpush1.bf16.msra.mxu0 %v127
    %152 = vmatprep.subr.bf16.mxu0 0
    %153 = vmatpush1.bf16.msra.mxu0 0
    %154 = vmatprep.subr.bf16.mxu0 0
    %155 = vmatpush1.bf16.msra.mxu0 0
    %156 = vmatprep.subr.bf16.mxu0 0
    %157 = vmatpush1.bf16.msra.mxu0 0
    %158 = vmatprep.subr.bf16.mxu0 0
    %159 = vmatpush1.bf16.msra.mxu0 0
    %160 = vmatprep.subr.bf16.mxu0 0
    %161 = vmatpush1.bf16.msra.mxu0 0
    %162 = vmatprep.subr.bf16.mxu0 0
    %163 = vmatpush1.bf16.msra.mxu0 0
    %164 = vmatprep.subr.bf16.mxu0 0
    %165 = vmatpush1.bf16.msra.mxu0 0
    %166 = vmatprep.subr.bf16.mxu0 0
    %167 = vmatpush1.bf16.msra.mxu0 0
    %168 = vmatprep.mubr.bf16.mxu0 0
    %169 = vmatmul.mubr.bf16.gmra.mrb[0].mxu0 %v84
    %v170 = vpop.f32.mrb[0].mxu0
    %v171 = vadd.f32 0.0, %v170
    %v172 = vpop.f32.mrb[0].mxu0
    %v173 = vpop.f32.mrb[0].mxu0
    %v174 = vadd.f32 0.0, %v173
    %v175 = vpop.f32.mrb[0].mxu0
    %176 = vmatprep.mubr.bf16.mxu0 0
    %177 = vmatmul.mubr.bf16.gmra.mrb[0].mxu0 %v85
    %v178 = vpop.f32.mrb[0].mxu0
    %v179 = vadd.f32 0.0, %v178
    %v180 = vpop.f32.mrb[0].mxu0
    %v181 = vpop.f32.mrb[0].mxu0
    %v182 = vadd.f32 0.0, %v181
    %v183 = vpop.f32.mrb[0].mxu0
    %184 = vdwg.mxu0
    %v185 = vadd.f32 %v52, %v171
    %v186 = vadd.f32 %v53, %v174
    %v187 = vadd.f32 %v54, %v179
    %v188 = vadd.f32 %v55, %v182
    %189 = vst [vmem:[#allocation2] sm:$0xff] %v185
    %190 = vst [vmem:[#allocation2 + $0x8] sm:$0xff] %v186
    %191 = vst [vmem:[#allocation2 + $0x10] sm:$0xff] %v187
    %192 = vst [vmem:[#allocation2 + $0x18] sm:$0xff] %v188
    // Predicated region
    $region26: #{tpu_custom_call.1} parent=1 // pred_check
      %p193 = pneg %p44
    $region27: #{tpu_custom_call.1} parent=1 // pred_check_branch
      %195 = sbr.rel (%p193) target = $region29
    $region28: #{tpu_custom_call.1} parent=1 // pred_region
      %v196 = vld [vmem:[#allocation2] sm:$0xff]
      %v197 = vld [vmem:[#allocation2 + $0x8] sm:$0xff]
      %v198 = vld [vmem:[#allocation2 + $0x10] sm:$0xff]
      %v199 = vld [vmem:[#allocation2 + $0x18] sm:$0xff]
      %v200 = vld [vmem:[%s2] sm:$0x1]
      %v202 = vlaneseq
      %v203 = vshrl.u32 %v202, 7
      %v204 = vsub.s32 0, %v203
      %v205 = vrot.slane %v200, %v204
      %v207 = vadd.f32 %v196, %v205
      %v208 = vadd.f32 %v197, %v205
      %v209 = vadd.f32 %v198, %v205
      %v210 = vadd.f32 %v199, %v205
      %211 = vst [vmem:[#allocation8] sm:$0xff] %v207
      %212 = vst [vmem:[#allocation8 + $0x8] sm:$0xff] %v208
      %213 = vst [vmem:[#allocation8 + $0x10] sm:$0xff] %v209
      %214 = vst [vmem:[#allocation8 + $0x18] sm:$0xff] %v210
    $region29: #{tpu_custom_call.1} parent=1 // pred_fallthru
      _
    // Predicated region
    $region30: #{tpu_custom_call.1} parent=1 // pred_check
      _
    $region31: #{tpu_custom_call.1} parent=1 // pred_check_branch
      %216 = sbr.rel (0) target = $region33
    $region32: #{tpu_custom_call.1} parent=1 // pred_region
      %s218 = ssub.s32 512, 512
      %219 = vsyncadd [#allocation5], %s218
      %s220 = sshll.u32 [#allocation8], 4
      %s221 = int_to_ptr.vmem [resolvable:$true] %s220
      %226 = dma.vmem_to_hbm [thread:$0]  %s221, 512, %s3, [#allocation5], 128, 128, 8
    $region33: #{tpu_custom_call.1} parent=1 // pred_fallthru
      _
    // Predicated region
    $region34: #{tpu_custom_call.1} parent=1 // pred_check
      _
    $region35: #{tpu_custom_call.1} parent=1 // pred_check_branch
      %228 = sbr.rel (0) target = $region37
    $region36: #{tpu_custom_call.1} parent=1 // pred_region
      %229 = dma.done [#allocation5], 512
    $region37: #{tpu_custom_call.1} parent=1 // pred_fallthru
      _
    %230 = vsyncpa [#allocation4], 1
    %231 = vsyncpa [#allocation7], 1
    %232 = vsyncpa [#allocation5], 1

</llo_original>
